<compile_context>
chip_gen: v5e
topology: v5e:2x2
jax: 0.10.0
libtpu: 0.0.40
codegen_flags: <defaults>
</compile_context>

<pallas_src>
import functools

import jax
import jax.numpy as jnp
from jax.experimental import pallas as pl


def _full_spec(shape):
    # Whole-array block, no grid: index_map takes zero grid args.
    return pl.BlockSpec(shape, lambda: (0,) * len(shape))


# ---------------------------------------------------------------------------
# Fused forward kernel: embeddings -> L x GRU cell -> Linear -> LeakyReLU -> Linear
# PyTorch GRU semantics per layer:
#   r = sigmoid(W_ir x + b_ir + W_hr h + b_hr)
#   z = sigmoid(W_iz x + b_iz + W_hz h + b_hz)
#   n = tanh   (W_in x + b_in + r * (W_hn h + b_hn))
#   h' = (1 - z) * n + z * h
# ---------------------------------------------------------------------------
def _fused_forward_kernel(src_idx_ref, trg_idx_ref, bits_ref, h_ref,
                          src_tab_ref, trg_tab_ref,
                          w_src_ref, w_trg_ref, w_bits_ref,
                          wih_rest_ref, whh_ref, bias_ref,
                          w1_ref, b1_ref, w2_ref, b2_ref,
                          out_ref, hnew_ref,
                          *, num_layers, hid):
    H = hid
    B = bits_ref.shape[0]

    # Embedding gather as one-hot @ table (MXU-friendly; avoids XLA gather glue).
    def embed(idx_ref, tab_ref):
        V = tab_ref.shape[0]
        idx = idx_ref[...]                                        # (B, 1) int32
        iota = jax.lax.broadcasted_iota(jnp.int32, (B, V), 1)
        onehot = (iota == idx).astype(jnp.float32)                # (B, V)
        return jnp.dot(onehot, tab_ref[...],
                       preferred_element_type=jnp.float32)        # (B, D)

    src_emb = embed(src_idx_ref, src_tab_ref)
    trg_emb = embed(trg_idx_ref, trg_tab_ref)
    bits = bits_ref[...]

    def gru_layer(layer, x_gates, h_prev):
        # x_gates: (B, 3H) input-path preactivations (bias not yet added)
        bias = bias_ref[layer]                                    # (1, 4H)
        b_i3 = bias[:, :3 * H]                                    # b_ir+b_hr | b_iz+b_hz | b_in
        b_hn = bias[:, 3 * H:]                                    # b_hn
        gi = x_gates + b_i3                                       # (B, 3H)
        gh = jnp.dot(h_prev, whh_ref[layer],
                     preferred_element_type=jnp.float32)          # (B, 3H)
        r = jax.nn.sigmoid(gi[:, :H] + gh[:, :H])
        z = jax.nn.sigmoid(gi[:, H:2 * H] + gh[:, H:2 * H])
        n = jnp.tanh(gi[:, 2 * H:] + r * (gh[:, 2 * H:] + b_hn))
        return (1.0 - z) * n + z * h_prev

    # Layer 0: input matmul split over [src_emb | trg_emb | bits] blocks (no concat).
    x_gates0 = (jnp.dot(src_emb, w_src_ref[...], preferred_element_type=jnp.float32)
                + jnp.dot(trg_emb, w_trg_ref[...], preferred_element_type=jnp.float32)
                + jnp.dot(bits, w_bits_ref[...], preferred_element_type=jnp.float32))
    h = gru_layer(0, x_gates0, h_ref[0])
    hnew_ref[0] = h

    for layer in range(1, num_layers):
        x_gates = jnp.dot(h, wih_rest_ref[layer - 1],
                          preferred_element_type=jnp.float32)
        h = gru_layer(layer, x_gates, h_ref[layer])
        hnew_ref[layer] = h

    # Head: Linear -> LeakyReLU(0.01) -> Linear (lane-padded output store).
    y = jnp.dot(h, w1_ref[...], preferred_element_type=jnp.float32) + b1_ref[...]
    y = jnp.where(y > 0, y, 0.01 * y)
    out_ref[...] = jnp.dot(y, w2_ref[...],
                           preferred_element_type=jnp.float32) + b2_ref[...]


# ---------------------------------------------------------------------------
# Parameter init (PyTorch layout) and one-time packing for the kernel.
# ---------------------------------------------------------------------------
def init_params(key, src_vocab, trg_vocab, src_embed_dim, trg_embed_dim,
                rnn_hid_dim, rnn_num_layers):
    keys = iter(jax.random.split(key, 64))

    def unif(shape, fan):
        bound = 1.0 / jnp.sqrt(jnp.float32(fan))
        return jax.random.uniform(next(keys), shape, jnp.float32, -bound, bound)

    params = {
        "src_embedding": jax.random.normal(next(keys), (src_vocab, src_embed_dim),
                                           jnp.float32),
        "trg_embedding": jax.random.normal(next(keys), (trg_vocab, trg_embed_dim),
                                           jnp.float32),
        "gru": [],
    }
    rnn_in_dim = src_embed_dim + trg_embed_dim + 4
    for layer in range(rnn_num_layers):
        in_dim = rnn_in_dim if layer == 0 else rnn_hid_dim
        params["gru"].append({
            "wih": unif((3 * rnn_hid_dim, in_dim), rnn_hid_dim),   # (3H, In)
            "whh": unif((3 * rnn_hid_dim, rnn_hid_dim), rnn_hid_dim),
            "bih": unif((3 * rnn_hid_dim,), rnn_hid_dim),
            "bhh": unif((3 * rnn_hid_dim,), rnn_hid_dim),
        })
    out_dim = trg_vocab + 3
    params["linear_w"] = unif((rnn_hid_dim, rnn_hid_dim), rnn_hid_dim)   # (out, in)
    params["linear_b"] = unif((rnn_hid_dim,), rnn_hid_dim)
    params["output_w"] = unif((out_dim, rnn_hid_dim), rnn_hid_dim)       # (out, in)
    params["output_b"] = unif((out_dim,), rnn_hid_dim)
    return params


def pack_params(params):
    """One-time re-layout of PyTorch-style params into kernel-ready slabs."""
    H = params["gru"][0]["whh"].shape[1]
    L = len(params["gru"])
    Ds = params["src_embedding"].shape[1]
    Dt = params["trg_embedding"].shape[1]
    V3 = params["output_w"].shape[0]
    V3_pad = max(128, ((V3 + 127) // 128) * 128)

    def bias_pack(p):
        bih, bhh = p["bih"], p["bhh"]
        # [b_ir+b_hr | b_iz+b_hz | b_in | b_hn]  -> (1, 4H)
        return jnp.concatenate([bih[:2 * H] + bhh[:2 * H],
                                bih[2 * H:], bhh[2 * H:]])[None, :]

    wih0_t = params["gru"][0]["wih"].T                      # (Ds+Dt+4, 3H)
    packed = {
        "num_layers": L, "hid": H, "v3": V3,
        "src_table": params["src_embedding"],               # (Vs, Ds)
        "trg_table": params["trg_embedding"],               # (Vt, Dt)
        "w_src": wih0_t[:Ds],                                # (Ds, 3H)
        "w_trg": wih0_t[Ds:Ds + Dt],                         # (Dt, 3H)
        "w_bits": wih0_t[Ds + Dt:],                          # (4, 3H)
        "whh": jnp.stack([p["whh"].T for p in params["gru"]]),          # (L, H, 3H)
        "bias": jnp.stack([bias_pack(p) for p in params["gru"]]),       # (L, 1, 4H)
        "w1": params["linear_w"].T,                          # (H, H)
        "b1": params["linear_b"][None, :],                   # (1, H)
        "w2": jnp.pad(params["output_w"].T, ((0, 0), (0, V3_pad - V3))),  # (H, 128)
        "b2": jnp.pad(params["output_b"], (0, V3_pad - V3))[None, :],     # (1, 128)
    }
    if L > 1:
        packed["wih_rest"] = jnp.stack(
            [params["gru"][l]["wih"].T for l in range(1, L)])            # (L-1, H, 3H)
    else:
        packed["wih_rest"] = jnp.zeros((1, H, 3 * H), jnp.float32)       # unused dummy
    return packed


# ---------------------------------------------------------------------------
# Forward wrapper: pad batch to a sublane multiple, call the fused kernel once.
# ---------------------------------------------------------------------------
def leaky_net_forward(packed, src, previous_output, bits, rnn_state):
    """src, previous_output: (1, B) int32; bits: (B, 4); rnn_state: (L, B, H).
    Returns (outputs (1, B, V3), new_rnn_state (L, B, H))."""
    L = packed["num_layers"]
    H = packed["hid"]
    V3 = packed["v3"]
    B = src.shape[1]
    B_pad = max(8, ((B + 7) // 8) * 8)
    pad = B_pad - B

    src_idx = jnp.pad(src[0].astype(jnp.int32), (0, pad)).reshape(B_pad, 1)
    trg_idx = jnp.pad(previous_output[0].astype(jnp.int32), (0, pad)).reshape(B_pad, 1)
    bits_p = jnp.pad(bits.astype(jnp.float32), ((0, pad), (0, 0)))
    h_p = jnp.pad(rnn_state.astype(jnp.float32), ((0, 0), (0, pad), (0, 0)))

    args = (src_idx, trg_idx, bits_p, h_p,
            packed["src_table"], packed["trg_table"],
            packed["w_src"], packed["w_trg"], packed["w_bits"],
            packed["wih_rest"], packed["whh"], packed["bias"],
            packed["w1"], packed["b1"], packed["w2"], packed["b2"])

    V3_pad = packed["w2"].shape[1]
    kernel = functools.partial(_fused_forward_kernel, num_layers=L, hid=H)
    out_pad, hnew_pad = pl.pallas_call(
        kernel,
        out_shape=(jax.ShapeDtypeStruct((B_pad, V3_pad), jnp.float32),
                   jax.ShapeDtypeStruct((L, B_pad, H), jnp.float32)),
        in_specs=[_full_spec(a.shape) for a in args],
        out_specs=(_full_spec((B_pad, V3_pad)), _full_spec((L, B_pad, H))),
    )(*args)

    outputs = out_pad[:B, :V3][None]          # (1, B, V3)
    new_state = hnew_pad[:, :B, :]            # (L, B, H)
    return outputs, new_state


# ---------------------------------------------------------------------------
# Pure-JAX reference (mirrors the PyTorch module) for correctness checking.
# ---------------------------------------------------------------------------
def _reference_forward(params, src, previous_output, bits, rnn_state):
    H = params["gru"][0]["whh"].shape[1]
    hp = jax.lax.Precision.HIGHEST
    src_emb = params["src_embedding"][src]
    trg_emb = params["trg_embedding"][previous_output]
    x = jnp.concatenate([src_emb, trg_emb, bits[None]], axis=2)[0]
    new_states = []
    for layer, p in enumerate(params["gru"]):
        h = rnn_state[layer]
        gi = jnp.dot(x, p["wih"].T, precision=hp) + p["bih"]
        gh = jnp.dot(h, p["whh"].T, precision=hp) + p["bhh"]
        r = jax.nn.sigmoid(gi[:, :H] + gh[:, :H])
        z = jax.nn.sigmoid(gi[:, H:2 * H] + gh[:, H:2 * H])
        n = jnp.tanh(gi[:, 2 * H:] + r * gh[:, 2 * H:])
        h = (1.0 - z) * n + z * h
        new_states.append(h)
        x = h
    y = jnp.dot(x, params["linear_w"].T, precision=hp) + params["linear_b"]
    y = jnp.where(y > 0, y, 0.01 * y)
    out = jnp.dot(y, params["output_w"].T, precision=hp) + params["output_b"]
    return out[None], jnp.stack(new_states)


if __name__ == "__main__":
    SRC_VOCAB = 16
    TRG_VOCAB = 13          # output dim = TRG_VOCAB + 3 = 16
    SRC_EMB = 32
    TRG_EMB = 32
    HID = 32
    LAYERS = 2
    B = 4

    key = jax.random.PRNGKey(0)
    kp, k1, k2, k3, k4 = jax.random.split(key, 5)

    params = init_params(kp, SRC_VOCAB, TRG_VOCAB, SRC_EMB, TRG_EMB, HID, LAYERS)
    packed = pack_params(params)   # one-time weight re-layout (hoisted out of forward)

    src = jax.random.randint(k1, (1, B), 0, SRC_VOCAB, dtype=jnp.int32)
    previous_output = jax.random.randint(k2, (1, B), 0, TRG_VOCAB, dtype=jnp.int32)
    bits = jax.random.uniform(k3, (B, 4), jnp.float32)
    rnn_state = jax.random.normal(k4, (LAYERS, B, HID), jnp.float32)

    outputs, new_state = leaky_net_forward(packed, src, previous_output, bits,
                                           rnn_state)
    jax.block_until_ready((outputs, new_state))

    assert outputs.shape == (1, B, TRG_VOCAB + 3)
    assert new_state.shape == (LAYERS, B, HID)

    ref_out, ref_state = _reference_forward(params, src, previous_output, bits,
                                            rnn_state)
    assert jnp.allclose(outputs, ref_out, atol=5e-2, rtol=5e-2), \
        float(jnp.max(jnp.abs(outputs - ref_out)))
    assert jnp.allclose(new_state, ref_state, atol=5e-2, rtol=5e-2), \
        float(jnp.max(jnp.abs(new_state - ref_state)))
    print("KERNEL_OK")
</pallas_src>

<mosaic_0001>
module attributes {stable_mosaic.version = 11 : i64} {
  func.func @_fused_forward_kernel(%arg0: memref<8x1xi32, #tpu.memory_space<vmem>>, %arg1: memref<8x1xi32, #tpu.memory_space<vmem>>, %arg2: memref<8x4xf32, #tpu.memory_space<vmem>>, %arg3: memref<2x8x32xf32, #tpu.memory_space<vmem>>, %arg4: memref<16x32xf32, #tpu.memory_space<vmem>>, %arg5: memref<13x32xf32, #tpu.memory_space<vmem>>, %arg6: memref<32x96xf32, #tpu.memory_space<vmem>>, %arg7: memref<32x96xf32, #tpu.memory_space<vmem>>, %arg8: memref<4x96xf32, #tpu.memory_space<vmem>>, %arg9: memref<1x32x96xf32, #tpu.memory_space<vmem>>, %arg10: memref<2x32x96xf32, #tpu.memory_space<vmem>>, %arg11: memref<2x1x128xf32, #tpu.memory_space<vmem>>, %arg12: memref<32x32xf32, #tpu.memory_space<vmem>>, %arg13: memref<1x32xf32, #tpu.memory_space<vmem>>, %arg14: memref<32x128xf32, #tpu.memory_space<vmem>>, %arg15: memref<1x128xf32, #tpu.memory_space<vmem>>, %arg16: memref<8x128xf32, #tpu.memory_space<vmem>>, %arg17: memref<2x8x32xf32, #tpu.memory_space<vmem>>) attributes {dimension_semantics = [], scalar_prefetch = 0 : i64, scratch_operands = 0 : i64, tpu.core_type = #tpu.core_type<tc>} {
    %c0 = arith.constant 0 : index
    %c0_0 = arith.constant 0 : index
    %0 = vector.load %arg0[%c0, %c0_0] : memref<8x1xi32, #tpu.memory_space<vmem>>, vector<8x1xi32>
    %1 = tpu.iota {dimensions = array<i32: 1>} : vector<8x16xi32>
    %2 = vector.broadcast %0 : vector<8x1xi32> to vector<8x16xi32>
    %3 = arith.cmpi eq, %1, %2 : vector<8x16xi32>
    %4 = arith.extui %3 : vector<8x16xi1> to vector<8x16xi32>
    %5 = arith.sitofp %4 : vector<8x16xi32> to vector<8x16xf32>
    %c0_1 = arith.constant 0 : index
    %c0_2 = arith.constant 0 : index
    %6 = vector.load %arg4[%c0_1, %c0_2] : memref<16x32xf32, #tpu.memory_space<vmem>>, vector<16x32xf32>
    %cst = arith.constant dense<0.000000e+00> : vector<8x32xf32>
    %7 = tpu.matmul %5, %6, %cst {dimension_numbers = #tpu.dot_dimension_numbers<[1], [0], [0], [1], [0, 0, 1, 1], [], []>} : vector<8x16xf32>, vector<16x32xf32>, vector<8x32xf32> -> vector<8x32xf32>
    %c0_3 = arith.constant 0 : index
    %c0_4 = arith.constant 0 : index
    %8 = vector.load %arg1[%c0_3, %c0_4] : memref<8x1xi32, #tpu.memory_space<vmem>>, vector<8x1xi32>
    %9 = tpu.iota {dimensions = array<i32: 1>} : vector<8x13xi32>
    %10 = vector.broadcast %8 : vector<8x1xi32> to vector<8x13xi32>
    %11 = arith.cmpi eq, %9, %10 : vector<8x13xi32>
    %12 = arith.extui %11 : vector<8x13xi1> to vector<8x13xi32>
    %13 = arith.sitofp %12 : vector<8x13xi32> to vector<8x13xf32>
    %c0_5 = arith.constant 0 : index
    %c0_6 = arith.constant 0 : index
    %14 = vector.load %arg5[%c0_5, %c0_6] : memref<13x32xf32, #tpu.memory_space<vmem>>, vector<13x32xf32>
    %cst_7 = arith.constant dense<0.000000e+00> : vector<8x32xf32>
    %15 = tpu.matmul %13, %14, %cst_7 {dimension_numbers = #tpu.dot_dimension_numbers<[1], [0], [0], [1], [0, 0, 1, 1], [], []>} : vector<8x13xf32>, vector<13x32xf32>, vector<8x32xf32> -> vector<8x32xf32>
    %c0_8 = arith.constant 0 : index
    %c0_9 = arith.constant 0 : index
    %16 = vector.load %arg2[%c0_8, %c0_9] : memref<8x4xf32, #tpu.memory_space<vmem>>, vector<8x4xf32>
    %c0_10 = arith.constant 0 : index
    %c0_11 = arith.constant 0 : index
    %17 = vector.load %arg6[%c0_10, %c0_11] : memref<32x96xf32, #tpu.memory_space<vmem>>, vector<32x96xf32>
    %cst_12 = arith.constant dense<0.000000e+00> : vector<8x96xf32>
    %18 = tpu.matmul %7, %17, %cst_12 {dimension_numbers = #tpu.dot_dimension_numbers<[1], [0], [0], [1], [0, 0, 1, 1], [], []>} : vector<8x32xf32>, vector<32x96xf32>, vector<8x96xf32> -> vector<8x96xf32>
    %c0_13 = arith.constant 0 : index
    %c0_14 = arith.constant 0 : index
    %19 = vector.load %arg7[%c0_13, %c0_14] : memref<32x96xf32, #tpu.memory_space<vmem>>, vector<32x96xf32>
    %cst_15 = arith.constant dense<0.000000e+00> : vector<8x96xf32>
    %20 = tpu.matmul %15, %19, %cst_15 {dimension_numbers = #tpu.dot_dimension_numbers<[1], [0], [0], [1], [0, 0, 1, 1], [], []>} : vector<8x32xf32>, vector<32x96xf32>, vector<8x96xf32> -> vector<8x96xf32>
    %21 = arith.addf %18, %20 : vector<8x96xf32>
    %c0_16 = arith.constant 0 : index
    %c0_17 = arith.constant 0 : index
    %22 = vector.load %arg8[%c0_16, %c0_17] : memref<4x96xf32, #tpu.memory_space<vmem>>, vector<4x96xf32>
    %cst_18 = arith.constant dense<0.000000e+00> : vector<8x96xf32>
    %23 = tpu.matmul %16, %22, %cst_18 {dimension_numbers = #tpu.dot_dimension_numbers<[1], [0], [0], [1], [0, 0, 1, 1], [], []>} : vector<8x4xf32>, vector<4x96xf32>, vector<8x96xf32> -> vector<8x96xf32>
    %24 = arith.addf %21, %23 : vector<8x96xf32>
    %c0_19 = arith.constant 0 : index
    %c0_20 = arith.constant 0 : index
    %c0_21 = arith.constant 0 : index
    %25 = vector.load %arg3[%c0_19, %c0_20, %c0_21] : memref<2x8x32xf32, #tpu.memory_space<vmem>>, vector<1x8x32xf32>
    %26 = vector.shape_cast %25 : vector<1x8x32xf32> to vector<8x32xf32>
    %c0_22 = arith.constant 0 : index
    %c0_23 = arith.constant 0 : index
    %c0_24 = arith.constant 0 : index
    %27 = vector.load %arg11[%c0_22, %c0_23, %c0_24] : memref<2x1x128xf32, #tpu.memory_space<vmem>>, vector<1x1x128xf32>
    %28 = vector.shape_cast %27 : vector<1x1x128xf32> to vector<1x128xf32>
    %29 = vector.extract_strided_slice %28 {offsets = [0, 0], sizes = [1, 96], strides = [1, 1]} : vector<1x128xf32> to vector<1x96xf32>
    %30 = vector.extract_strided_slice %28 {offsets = [0, 96], sizes = [1, 32], strides = [1, 1]} : vector<1x128xf32> to vector<1x32xf32>
    %31 = vector.broadcast %29 : vector<1x96xf32> to vector<8x96xf32>
    %32 = arith.addf %24, %31 : vector<8x96xf32>
    %c0_25 = arith.constant 0 : index
    %c0_26 = arith.constant 0 : index
    %c0_27 = arith.constant 0 : index
    %33 = vector.load %arg10[%c0_25, %c0_26, %c0_27] : memref<2x32x96xf32, #tpu.memory_space<vmem>>, vector<1x32x96xf32>
    %34 = vector.shape_cast %33 : vector<1x32x96xf32> to vector<32x96xf32>
    %cst_28 = arith.constant dense<0.000000e+00> : vector<8x96xf32>
    %35 = tpu.matmul %26, %34, %cst_28 {dimension_numbers = #tpu.dot_dimension_numbers<[1], [0], [0], [1], [0, 0, 1, 1], [], []>} : vector<8x32xf32>, vector<32x96xf32>, vector<8x96xf32> -> vector<8x96xf32>
    %36 = vector.extract_strided_slice %32 {offsets = [0, 0], sizes = [8, 32], strides = [1, 1]} : vector<8x96xf32> to vector<8x32xf32>
    %37 = vector.extract_strided_slice %35 {offsets = [0, 0], sizes = [8, 32], strides = [1, 1]} : vector<8x96xf32> to vector<8x32xf32>
    %38 = arith.addf %36, %37 : vector<8x32xf32>
    %39 = arith.negf %38 : vector<8x32xf32>
    %40 = math.exp %39 : vector<8x32xf32>
    %cst_29 = arith.constant 1.000000e+00 : f32
    %41 = vector.broadcast %cst_29 : f32 to vector<8x32xf32>
    %42 = arith.addf %41, %40 : vector<8x32xf32>
    %43 = arith.divf %41, %42 : vector<8x32xf32>
    %44 = vector.extract_strided_slice %32 {offsets = [0, 32], sizes = [8, 32], strides = [1, 1]} : vector<8x96xf32> to vector<8x32xf32>
    %45 = vector.extract_strided_slice %35 {offsets = [0, 32], sizes = [8, 32], strides = [1, 1]} : vector<8x96xf32> to vector<8x32xf32>
    %46 = arith.addf %44, %45 : vector<8x32xf32>
    %47 = arith.negf %46 : vector<8x32xf32>
    %48 = math.exp %47 : vector<8x32xf32>
    %cst_30 = arith.constant 1.000000e+00 : f32
    %49 = vector.broadcast %cst_30 : f32 to vector<8x32xf32>
    %50 = arith.addf %49, %48 : vector<8x32xf32>
    %51 = arith.divf %49, %50 : vector<8x32xf32>
    %52 = vector.extract_strided_slice %32 {offsets = [0, 64], sizes = [8, 32], strides = [1, 1]} : vector<8x96xf32> to vector<8x32xf32>
    %53 = vector.extract_strided_slice %35 {offsets = [0, 64], sizes = [8, 32], strides = [1, 1]} : vector<8x96xf32> to vector<8x32xf32>
    %54 = vector.broadcast %30 : vector<1x32xf32> to vector<8x32xf32>
    %55 = arith.addf %53, %54 : vector<8x32xf32>
    %56 = arith.mulf %43, %55 : vector<8x32xf32>
    %57 = arith.addf %52, %56 : vector<8x32xf32>
    %58 = math.tanh %57 : vector<8x32xf32>
    %cst_31 = arith.constant 1.000000e+00 : f32
    %59 = vector.broadcast %cst_31 : f32 to vector<8x32xf32>
    %60 = arith.subf %59, %51 : vector<8x32xf32>
    %61 = arith.mulf %60, %58 : vector<8x32xf32>
    %62 = arith.mulf %51, %26 : vector<8x32xf32>
    %63 = arith.addf %61, %62 : vector<8x32xf32>
    %c0_32 = arith.constant 0 : index
    %c0_33 = arith.constant 0 : index
    %c0_34 = arith.constant 0 : index
    %64 = vector.load %arg17[%c0_32, %c0_33, %c0_34] : memref<2x8x32xf32, #tpu.memory_space<vmem>>, vector<1x8x32xf32>
    %65 = vector.shape_cast %64 : vector<1x8x32xf32> to vector<8x32xf32>
    %66 = vector.shape_cast %63 : vector<8x32xf32> to vector<1x8x32xf32>
    tpu.vector_store %arg17[%c0_32, %c0_33, %c0_34], %66 {strides = array<i32>} : memref<2x8x32xf32, #tpu.memory_space<vmem>>, vector<1x8x32xf32>,
    %c0_35 = arith.constant 0 : index
    %c0_36 = arith.constant 0 : index
    %c0_37 = arith.constant 0 : index
    %67 = vector.load %arg9[%c0_35, %c0_36, %c0_37] : memref<1x32x96xf32, #tpu.memory_space<vmem>>, vector<1x32x96xf32>
    %68 = vector.shape_cast %67 : vector<1x32x96xf32> to vector<32x96xf32>
    %cst_38 = arith.constant dense<0.000000e+00> : vector<8x96xf32>
    %69 = tpu.matmul %63, %68, %cst_38 {dimension_numbers = #tpu.dot_dimension_numbers<[1], [0], [0], [1], [0, 0, 1, 1], [], []>} : vector<8x32xf32>, vector<32x96xf32>, vector<8x96xf32> -> vector<8x96xf32>
    %c1 = arith.constant 1 : index
    %c0_39 = arith.constant 0 : index
    %c0_40 = arith.constant 0 : index
    %70 = vector.load %arg3[%c1, %c0_39, %c0_40] : memref<2x8x32xf32, #tpu.memory_space<vmem>>, vector<1x8x32xf32>
    %71 = vector.shape_cast %70 : vector<1x8x32xf32> to vector<8x32xf32>
    %c1_41 = arith.constant 1 : index
    %c0_42 = arith.constant 0 : index
    %c0_43 = arith.constant 0 : index
    %72 = vector.load %arg11[%c1_41, %c0_42, %c0_43] : memref<2x1x128xf32, #tpu.memory_space<vmem>>, vector<1x1x128xf32>
    %73 = vector.shape_cast %72 : vector<1x1x128xf32> to vector<1x128xf32>
    %74 = vector.extract_strided_slice %73 {offsets = [0, 0], sizes = [1, 96], strides = [1, 1]} : vector<1x128xf32> to vector<1x96xf32>
    %75 = vector.extract_strided_slice %73 {offsets = [0, 96], sizes = [1, 32], strides = [1, 1]} : vector<1x128xf32> to vector<1x32xf32>
    %76 = vector.broadcast %74 : vector<1x96xf32> to vector<8x96xf32>
    %77 = arith.addf %69, %76 : vector<8x96xf32>
    %c1_44 = arith.constant 1 : index
    %c0_45 = arith.constant 0 : index
    %c0_46 = arith.constant 0 : index
    %78 = vector.load %arg10[%c1_44, %c0_45, %c0_46] : memref<2x32x96xf32, #tpu.memory_space<vmem>>, vector<1x32x96xf32>
    %79 = vector.shape_cast %78 : vector<1x32x96xf32> to vector<32x96xf32>
    %cst_47 = arith.constant dense<0.000000e+00> : vector<8x96xf32>
    %80 = tpu.matmul %71, %79, %cst_47 {dimension_numbers = #tpu.dot_dimension_numbers<[1], [0], [0], [1], [0, 0, 1, 1], [], []>} : vector<8x32xf32>, vector<32x96xf32>, vector<8x96xf32> -> vector<8x96xf32>
    %81 = vector.extract_strided_slice %77 {offsets = [0, 0], sizes = [8, 32], strides = [1, 1]} : vector<8x96xf32> to vector<8x32xf32>
    %82 = vector.extract_strided_slice %80 {offsets = [0, 0], sizes = [8, 32], strides = [1, 1]} : vector<8x96xf32> to vector<8x32xf32>
    %83 = arith.addf %81, %82 : vector<8x32xf32>
    %84 = arith.negf %83 : vector<8x32xf32>
    %85 = math.exp %84 : vector<8x32xf32>
    %cst_48 = arith.constant 1.000000e+00 : f32
    %86 = vector.broadcast %cst_48 : f32 to vector<8x32xf32>
    %87 = arith.addf %86, %85 : vector<8x32xf32>
    %88 = arith.divf %86, %87 : vector<8x32xf32>
    %89 = vector.extract_strided_slice %77 {offsets = [0, 32], sizes = [8, 32], strides = [1, 1]} : vector<8x96xf32> to vector<8x32xf32>
    %90 = vector.extract_strided_slice %80 {offsets = [0, 32], sizes = [8, 32], strides = [1, 1]} : vector<8x96xf32> to vector<8x32xf32>
    %91 = arith.addf %89, %90 : vector<8x32xf32>
    %92 = arith.negf %91 : vector<8x32xf32>
    %93 = math.exp %92 : vector<8x32xf32>
    %cst_49 = arith.constant 1.000000e+00 : f32
    %94 = vector.broadcast %cst_49 : f32 to vector<8x32xf32>
    %95 = arith.addf %94, %93 : vector<8x32xf32>
    %96 = arith.divf %94, %95 : vector<8x32xf32>
    %97 = vector.extract_strided_slice %77 {offsets = [0, 64], sizes = [8, 32], strides = [1, 1]} : vector<8x96xf32> to vector<8x32xf32>
    %98 = vector.extract_strided_slice %80 {offsets = [0, 64], sizes = [8, 32], strides = [1, 1]} : vector<8x96xf32> to vector<8x32xf32>
    %99 = vector.broadcast %75 : vector<1x32xf32> to vector<8x32xf32>
    %100 = arith.addf %98, %99 : vector<8x32xf32>
    %101 = arith.mulf %88, %100 : vector<8x32xf32>
    %102 = arith.addf %97, %101 : vector<8x32xf32>
    %103 = math.tanh %102 : vector<8x32xf32>
    %cst_50 = arith.constant 1.000000e+00 : f32
    %104 = vector.broadcast %cst_50 : f32 to vector<8x32xf32>
    %105 = arith.subf %104, %96 : vector<8x32xf32>
    %106 = arith.mulf %105, %103 : vector<8x32xf32>
    %107 = arith.mulf %96, %71 : vector<8x32xf32>
    %108 = arith.addf %106, %107 : vector<8x32xf32>
    %c1_51 = arith.constant 1 : index
    %c0_52 = arith.constant 0 : index
    %c0_53 = arith.constant 0 : index
    %109 = vector.load %arg17[%c1_51, %c0_52, %c0_53] : memref<2x8x32xf32, #tpu.memory_space<vmem>>, vector<1x8x32xf32>
    %110 = vector.shape_cast %109 : vector<1x8x32xf32> to vector<8x32xf32>
    %111 = vector.shape_cast %108 : vector<8x32xf32> to vector<1x8x32xf32>
    tpu.vector_store %arg17[%c1_51, %c0_52, %c0_53], %111 {strides = array<i32>} : memref<2x8x32xf32, #tpu.memory_space<vmem>>, vector<1x8x32xf32>,
    %c0_54 = arith.constant 0 : index
    %c0_55 = arith.constant 0 : index
    %112 = vector.load %arg12[%c0_54, %c0_55] : memref<32x32xf32, #tpu.memory_space<vmem>>, vector<32x32xf32>
    %cst_56 = arith.constant dense<0.000000e+00> : vector<8x32xf32>
    %113 = tpu.matmul %108, %112, %cst_56 {dimension_numbers = #tpu.dot_dimension_numbers<[1], [0], [0], [1], [0, 0, 1, 1], [], []>} : vector<8x32xf32>, vector<32x32xf32>, vector<8x32xf32> -> vector<8x32xf32>
    %c0_57 = arith.constant 0 : index
    %c0_58 = arith.constant 0 : index
    %114 = vector.load %arg13[%c0_57, %c0_58] : memref<1x32xf32, #tpu.memory_space<vmem>>, vector<1x32xf32>
    %115 = vector.broadcast %114 : vector<1x32xf32> to vector<8x32xf32>
    %116 = arith.addf %113, %115 : vector<8x32xf32>
    %cst_59 = arith.constant 0.000000e+00 : f32
    %117 = vector.broadcast %cst_59 : f32 to vector<8x32xf32>
    %118 = arith.cmpf ogt, %116, %117 : vector<8x32xf32>
    %cst_60 = arith.constant 0.00999999977 : f32
    %119 = vector.broadcast %cst_60 : f32 to vector<8x32xf32>
    %120 = arith.mulf %119, %116 : vector<8x32xf32>
    %121 = arith.select %118, %116, %120 : vector<8x32xi1>, vector<8x32xf32>
    %c0_61 = arith.constant 0 : index
    %c0_62 = arith.constant 0 : index
    %122 = vector.load %arg14[%c0_61, %c0_62] : memref<32x128xf32, #tpu.memory_space<vmem>>, vector<32x128xf32>
    %cst_63 = arith.constant dense<0.000000e+00> : vector<8x128xf32>
    %123 = tpu.matmul %121, %122, %cst_63 {dimension_numbers = #tpu.dot_dimension_numbers<[1], [0], [0], [1], [0, 0, 1, 1], [], []>} : vector<8x32xf32>, vector<32x128xf32>, vector<8x128xf32> -> vector<8x128xf32>
    %c0_64 = arith.constant 0 : index
    %c0_65 = arith.constant 0 : index
    %124 = vector.load %arg15[%c0_64, %c0_65] : memref<1x128xf32, #tpu.memory_space<vmem>>, vector<1x128xf32>
    %125 = vector.broadcast %124 : vector<1x128xf32> to vector<8x128xf32>
    %126 = arith.addf %123, %125 : vector<8x128xf32>
    %c0_66 = arith.constant 0 : index
    %c0_67 = arith.constant 0 : index
    %127 = vector.load %arg16[%c0_66, %c0_67] : memref<8x128xf32, #tpu.memory_space<vmem>>, vector<8x128xf32>
    tpu.vector_store %arg16[%c0_66, %c0_67], %126 {strides = array<i32>} : memref<8x128xf32, #tpu.memory_space<vmem>>, vector<8x128xf32>,
    return
  }
}

</mosaic_0001>

<llo_original>
// kernel: tpu_custom_call.1
$region0: #{tpu_custom_call.1}
  #allocation0 [shape = 'u32[]', space=smem, size = 0x4, offset = 0x4, fixed_abs, tag = 'smem constant byte address 0x4 - core index']
  #allocation1 [shape = 'u32[72,128]{1,0:T(1,128)}', space=vmem, size = 0x9000, scoped, tag = 'internal scratch']
  %s0 = inlined_call_operand.vmem [shape: s32[8,1], index: 0, kind: input, shape index: {}]
  %s1 = inlined_call_operand.vmem [shape: s32[8,1], index: 1, kind: input, shape index: {}]
  %s2 = inlined_call_operand.vmem [shape: f32[8,4], index: 2, kind: input, shape index: {}]
  %s3 = inlined_call_operand.vmem [shape: f32[2,8,32], index: 3, kind: input, shape index: {}]
  %s4 = inlined_call_operand.hbm [shape: f32[16,32], index: 4, kind: input, shape index: {}]
  %s5 = inlined_call_operand.hbm [shape: f32[13,32], index: 5, kind: input, shape index: {}]
  %s6 = inlined_call_operand.hbm [shape: f32[32,96], index: 6, kind: input, shape index: {}]
  %s7 = inlined_call_operand.hbm [shape: f32[32,96], index: 7, kind: input, shape index: {}]
  %s8 = inlined_call_operand.vmem [shape: f32[4,96], index: 8, kind: input, shape index: {}]
  %s9 = inlined_call_operand.hbm [shape: f32[1,32,96], index: 9, kind: input, shape index: {}]
  %s10 = inlined_call_operand.hbm [shape: f32[2,32,96], index: 10, kind: input, shape index: {}]
  %s11 = inlined_call_operand.vmem [shape: f32[2,1,128], index: 11, kind: input, shape index: {}]
  %s12 = inlined_call_operand.hbm [shape: f32[32,32], index: 12, kind: input, shape index: {}]
  %s13 = inlined_call_operand.vmem [shape: f32[1,32], index: 13, kind: input, shape index: {}]
  %s14 = inlined_call_operand.hbm [shape: f32[32,128], index: 14, kind: input, shape index: {}]
  %s15 = inlined_call_operand.vmem [shape: f32[1,128], index: 15, kind: input, shape index: {}]
  %s16 = inlined_call_operand.hbm [shape: f32[8,128], index: 16, kind: output, shape index: {0}]
  %s17 = inlined_call_operand.hbm [shape: f32[2,8,32], index: 17, kind: output, shape index: {1}]
  %18 = xla_tuple %s16, %s17
  %s19 = sld [smem:[#allocation0]]
  $region114: #{tpu_custom_call.1} parent=0
    _
  %s21 = ssub.s32 1, %s19
  %s22 = scalar_select 0, %s21, %s19
  $region1: #{tpu_custom_call.1} parent=0
    #allocation2 [shape = 'u8[8192]{0}', space=vmem, size = 0x2000, scoped, tag = 'input window, operand 4, single buffered']
    #allocation3 [shape = 's32[1]{0}', space=sflag, size = 0x4, scoped, tag = 'scoped memory for tpu_custom_call.1']
    #allocation4 [shape = 's32[1]{0}', space=sflag, size = 0x4, scoped, tag = 'scoped memory for tpu_custom_call.1']
    #allocation5 [shape = 'u8[8192]{0}', space=vmem, size = 0x2000, scoped, tag = 'input window, operand 5, single buffered']
    #allocation6 [shape = 's32[1]{0}', space=sflag, size = 0x4, scoped, tag = 'scoped memory for tpu_custom_call.1']
    #allocation7 [shape = 'u8[16384]{0}', space=vmem, size = 0x4000, scoped, tag = 'input window, operand 6, single buffered']
    #allocation8 [shape = 'u8[16384]{0}', space=vmem, size = 0x4000, scoped, tag = 'input window, operand 7, single buffered']
    #allocation9 [shape = 's32[1]{0}', space=sflag, size = 0x4, scoped, tag = 'scoped memory for tpu_custom_call.1']
    #allocation10 [shape = 'u8[16384]{0}', space=vmem, size = 0x4000, scoped, tag = 'input window, operand 9, single buffered']
    #allocation11 [shape = 'u8[32768]{0}', space=vmem, size = 0x8000, scoped, tag = 'input window, operand 10, single buffered']
    #allocation12 [shape = 's32[1]{0}', space=sflag, size = 0x4, scoped, tag = 'scoped memory for tpu_custom_call.1']
    #allocation13 [shape = 'u8[16384]{0}', space=vmem, size = 0x4000, scoped, tag = 'input window, operand 12, single buffered']
    #allocation14 [shape = 'u8[16384]{0}', space=vmem, size = 0x4000, scoped, tag = 'input window, operand 14, single buffered']
    #allocation15 [shape = 's32[1]{0}', space=sflag, size = 0x4, scoped, tag = 'scoped memory for tpu_custom_call.1']
    #allocation16 [shape = 'u8[4096]{0}', space=vmem, size = 0x1000, scoped, tag = 'output window, operand 0, single buffered']
    #allocation17 [shape = 'u8[8192]{0}', space=vmem, size = 0x2000, scoped, tag = 'output window, operand 1, single buffered']
    #allocation18 [shape = 's32[1]{0}', space=sflag, size = 0x4, scoped, tag = 'scoped memory for tpu_custom_call.1']
    %23 = vsyncpa [#allocation3], 0
    %24 = vsyncpa [#allocation6], 0
    %25 = vsyncpa [#allocation9], 0
    %26 = vsyncpa [#allocation12], 0
    %27 = vsyncpa [#allocation15], 0
    %28 = vsyncpa [#allocation4], 0
    %29 = vsyncpa [#allocation18], 0
    // Predicated region
    $region2: #{tpu_custom_call.1} parent=1 // pred_check
      _
    $region3: #{tpu_custom_call.1} parent=1 // pred_check_branch
      %31 = sbr.rel (0) target = $region5
    $region4: #{tpu_custom_call.1} parent=1 // pred_region
      _
    $region5: #{tpu_custom_call.1} parent=1 // pred_fallthru
      _
    // Predicated region
    $region6: #{tpu_custom_call.1} parent=1 // pred_check
      _
    $region7: #{tpu_custom_call.1} parent=1 // pred_check_branch
      %33 = sbr.rel (0) target = $region9
    $region8: #{tpu_custom_call.1} parent=1 // pred_region
      _
    $region9: #{tpu_custom_call.1} parent=1 // pred_fallthru
      _
    // Predicated region
    $region10: #{tpu_custom_call.1} parent=1 // pred_check
      _
    $region11: #{tpu_custom_call.1} parent=1 // pred_check_branch
      %35 = sbr.rel (0) target = $region13
    $region12: #{tpu_custom_call.1} parent=1 // pred_region
      _
    $region13: #{tpu_custom_call.1} parent=1 // pred_fallthru
      _
    // Predicated region
    $region14: #{tpu_custom_call.1} parent=1 // pred_check
      _
    $region15: #{tpu_custom_call.1} parent=1 // pred_check_branch
      %37 = sbr.rel (0) target = $region17
    $region16: #{tpu_custom_call.1} parent=1 // pred_region
      _
    $region17: #{tpu_custom_call.1} parent=1 // pred_fallthru
      _
    // Predicated region
    $region18: #{tpu_custom_call.1} parent=1 // pred_check
      _
    $region19: #{tpu_custom_call.1} parent=1 // pred_check_branch
      %39 = sbr.rel (0) target = $region21
    $region20: #{tpu_custom_call.1} parent=1 // pred_region
      %41 = vsyncadd [#allocation3], 0
      %s42 = sshll.u32 %s4, 4
      %s43 = int_to_ptr.hbm [resolvable:$true] %s42
      %s44 = sshll.u32 [#allocation2], 4
      %s45 = int_to_ptr.vmem [resolvable:$true] %s44
      %50 = dma.hbm_to_vmem [thread:$0]  %s43, 256, %s45, [#allocation3], 128, 128, 8
    $region21: #{tpu_custom_call.1} parent=1 // pred_fallthru
      _
    // Predicated region
    $region22: #{tpu_custom_call.1} parent=1 // pred_check
      _
    $region23: #{tpu_custom_call.1} parent=1 // pred_check_branch
      %52 = sbr.rel (0) target = $region25
    $region24: #{tpu_custom_call.1} parent=1 // pred_region
      %54 = vsyncadd [#allocation6], 0
      %s55 = sshll.u32 %s5, 4
      %s56 = int_to_ptr.hbm [resolvable:$true] %s55
      %s57 = sshll.u32 [#allocation5], 4
      %s58 = int_to_ptr.vmem [resolvable:$true] %s57
      %63 = dma.hbm_to_vmem [thread:$0]  %s56, 256, %s58, [#allocation6], 128, 128, 8
    $region25: #{tpu_custom_call.1} parent=1 // pred_fallthru
      _
    // Predicated region
    $region26: #{tpu_custom_call.1} parent=1 // pred_check
      _
    $region27: #{tpu_custom_call.1} parent=1 // pred_check_branch
      %65 = sbr.rel (0) target = $region29
    $region28: #{tpu_custom_call.1} parent=1 // pred_region
      %67 = vsyncadd [#allocation6], 0
      %s68 = sshll.u32 %s6, 4
      %s69 = int_to_ptr.hbm [resolvable:$true] %s68
      %s70 = sshll.u32 [#allocation7], 4
      %s71 = int_to_ptr.vmem [resolvable:$true] %s70
      %76 = dma.hbm_to_vmem [thread:$0]  %s69, 512, %s71, [#allocation6], 128, 128, 8
    $region29: #{tpu_custom_call.1} parent=1 // pred_fallthru
      _
    // Predicated region
    $region30: #{tpu_custom_call.1} parent=1 // pred_check
      _
    $region31: #{tpu_custom_call.1} parent=1 // pred_check_branch
      %78 = sbr.rel (0) target = $region33
    $region32: #{tpu_custom_call.1} parent=1 // pred_region
      %80 = vsyncadd [#allocation9], 0
      %s81 = sshll.u32 %s7, 4
      %s82 = int_to_ptr.hbm [resolvable:$true] %s81
      %s83 = sshll.u32 [#allocation8], 4
      %s84 = int_to_ptr.vmem [resolvable:$true] %s83
      %89 = dma.hbm_to_vmem [thread:$0]  %s82, 512, %s84, [#allocation9], 128, 128, 8
    $region33: #{tpu_custom_call.1} parent=1 // pred_fallthru
      _
    // Predicated region
    $region34: #{tpu_custom_call.1} parent=1 // pred_check
      _
    $region35: #{tpu_custom_call.1} parent=1 // pred_check_branch
      %91 = sbr.rel (0) target = $region37
    $region36: #{tpu_custom_call.1} parent=1 // pred_region
      _
    $region37: #{tpu_custom_call.1} parent=1 // pred_fallthru
      _
    // Predicated region
    $region38: #{tpu_custom_call.1} parent=1 // pred_check
      _
    $region39: #{tpu_custom_call.1} parent=1 // pred_check_branch
      %93 = sbr.rel (0) target = $region41
    $region40: #{tpu_custom_call.1} parent=1 // pred_region
      %95 = vsyncadd [#allocation9], 0
      %s96 = sshll.u32 %s9, 4
      %s97 = int_to_ptr.hbm [resolvable:$true] %s96
      %s98 = sshll.u32 [#allocation10], 4
      %s99 = int_to_ptr.vmem [resolvable:$true] %s98
      %104 = dma.hbm_to_vmem [thread:$0]  %s97, 512, %s99, [#allocation9], 128, 128, 8
    $region41: #{tpu_custom_call.1} parent=1 // pred_fallthru
      _
    // Predicated region
    $region42: #{tpu_custom_call.1} parent=1 // pred_check
      _
    $region43: #{tpu_custom_call.1} parent=1 // pred_check_branch
      %106 = sbr.rel (0) target = $region45
    $region44: #{tpu_custom_call.1} parent=1 // pred_region
      %108 = vsyncadd [#allocation12], 0
      %s109 = sshll.u32 %s10, 4
      %s110 = int_to_ptr.hbm [resolvable:$true] %s109
      %s111 = sshll.u32 [#allocation11], 4
      %s112 = int_to_ptr.vmem [resolvable:$true] %s111
      %117 = dma.hbm_to_vmem [thread:$0]  %s110, 1024, %s112, [#allocation12], 128, 128, 8
    $region45: #{tpu_custom_call.1} parent=1 // pred_fallthru
      _
    // Predicated region
    $region46: #{tpu_custom_call.1} parent=1 // pred_check
      _
    $region47: #{tpu_custom_call.1} parent=1 // pred_check_branch
      %119 = sbr.rel (0) target = $region49
    $region48: #{tpu_custom_call.1} parent=1 // pred_region
      _
    $region49: #{tpu_custom_call.1} parent=1 // pred_fallthru
      _
    // Predicated region
    $region50: #{tpu_custom_call.1} parent=1 // pred_check
      _
    $region51: #{tpu_custom_call.1} parent=1 // pred_check_branch
      %121 = sbr.rel (0) target = $region53
    $region52: #{tpu_custom_call.1} parent=1 // pred_region
      %123 = vsyncadd [#allocation12], 0
      %s124 = sshll.u32 %s12, 4
      %s125 = int_to_ptr.hbm [resolvable:$true] %s124
      %s126 = sshll.u32 [#allocation13], 4
      %s127 = int_to_ptr.vmem [resolvable:$true] %s126
      %132 = dma.hbm_to_vmem [thread:$0]  %s125, 512, %s127, [#allocation12], 128, 128, 8
    $region53: #{tpu_custom_call.1} parent=1 // pred_fallthru
      _
    // Predicated region
    $region54: #{tpu_custom_call.1} parent=1 // pred_check
      _
    $region55: #{tpu_custom_call.1} parent=1 // pred_check_branch
      %134 = sbr.rel (0) target = $region57
    $region56: #{tpu_custom_call.1} parent=1 // pred_region
      _
    $region57: #{tpu_custom_call.1} parent=1 // pred_fallthru
      _
    // Predicated region
    $region58: #{tpu_custom_call.1} parent=1 // pred_check
      _
    $region59: #{tpu_custom_call.1} parent=1 // pred_check_branch
      %136 = sbr.rel (0) target = $region61
    $region60: #{tpu_custom_call.1} parent=1 // pred_region
      %138 = vsyncadd [#allocation15], 0
      %s139 = sshll.u32 %s14, 4
      %s140 = int_to_ptr.hbm [resolvable:$true] %s139
      %s141 = sshll.u32 [#allocation14], 4
      %s142 = int_to_ptr.vmem [resolvable:$true] %s141
      %147 = dma.hbm_to_vmem [thread:$0]  %s140, 512, %s142, [#allocation15], 128, 128, 8
    $region61: #{tpu_custom_call.1} parent=1 // pred_fallthru
      _
    // Predicated region
    $region62: #{tpu_custom_call.1} parent=1 // pred_check
      _
    $region63: #{tpu_custom_call.1} parent=1 // pred_check_branch
      %149 = sbr.rel (0) target = $region65
    $region64: #{tpu_custom_call.1} parent=1 // pred_region
      _
    $region65: #{tpu_custom_call.1} parent=1 // pred_fallthru
      _
    // Predicated region
    $region66: #{tpu_custom_call.1} parent=1 // pred_check
      _
    $region67: #{tpu_custom_call.1} parent=1 // pred_check_branch
      %151 = sbr.rel (0) target = $region69
    $region68: #{tpu_custom_call.1} parent=1 // pred_region
      %153 = dma.done [#allocation3], 256
    $region69: #{tpu_custom_call.1} parent=1 // pred_fallthru
      _
    // Predicated region
    $region70: #{tpu_custom_call.1} parent=1 // pred_check
      _
    $region71: #{tpu_custom_call.1} parent=1 // pred_check_branch
      %155 = sbr.rel (0) target = $region73
    $region72: #{tpu_custom_call.1} parent=1 // pred_region
      %157 = dma.done [#allocation6], 256
    $region73: #{tpu_custom_call.1} parent=1 // pred_fallthru
      _
    // Predicated region
    $region74: #{tpu_custom_call.1} parent=1 // pred_check
      _
    $region75: #{tpu_custom_call.1} parent=1 // pred_check_branch
      %159 = sbr.rel (0) target = $region77
    $region76: #{tpu_custom_call.1} parent=1 // pred_region
      %161 = dma.done [#allocation6], 512
    $region77: #{tpu_custom_call.1} parent=1 // pred_fallthru
      _
    // Predicated region
    $region78: #{tpu_custom_call.1} parent=1 // pred_check
      _
    $region79: #{tpu_custom_call.1} parent=1 // pred_check_branch
      %163 = sbr.rel (0) target = $region81
    $region80: #{tpu_custom_call.1} parent=1 // pred_region
      %165 = dma.done [#allocation9], 512
    $region81: #{tpu_custom_call.1} parent=1 // pred_fallthru
      _
    // Predicated region
    $region82: #{tpu_custom_call.1} parent=1 // pred_check
      _
    $region83: #{tpu_custom_call.1} parent=1 // pred_check_branch
      %167 = sbr.rel (0) target = $region85
    $region84: #{tpu_custom_call.1} parent=1 // pred_region
      %169 = dma.done [#allocation9], 512
    $region85: #{tpu_custom_call.1} parent=1 // pred_fallthru
      _
    // Predicated region
    $region86: #{tpu_custom_call.1} parent=1 // pred_check
      _
    $region87: #{tpu_custom_call.1} parent=1 // pred_check_branch
      %171 = sbr.rel (0) target = $region89
    $region88: #{tpu_custom_call.1} parent=1 // pred_region
      %173 = dma.done [#allocation12], 1024
    $region89: #{tpu_custom_call.1} parent=1 // pred_fallthru
      _
    // Predicated region
    $region90: #{tpu_custom_call.1} parent=1 // pred_check
      _
    $region91: #{tpu_custom_call.1} parent=1 // pred_check_branch
      %175 = sbr.rel (0) target = $region93
    $region92: #{tpu_custom_call.1} parent=1 // pred_region
      %177 = dma.done [#allocation12], 512
    $region93: #{tpu_custom_call.1} parent=1 // pred_fallthru
      _
    // Predicated region
    $region94: #{tpu_custom_call.1} parent=1 // pred_check
      _
    $region95: #{tpu_custom_call.1} parent=1 // pred_check_branch
      %179 = sbr.rel (0) target = $region97
    $region96: #{tpu_custom_call.1} parent=1 // pred_region
      %181 = dma.done [#allocation15], 512
    $region97: #{tpu_custom_call.1} parent=1 // pred_fallthru
      _
    %v182 = vld [vmem:[%s0] sm:$0xff]
    %v183 = vlaneseq
    %v184 = vand.u32 %v183, 127
    %185 = vset.pattern.permute.xlu0 0
    %186 = vperm.xlu0 %185, %v182
    %v187 = vpop.permute.xlu0 %186
    %vm188 = vcmp.eq.s32.totalorder %v184, %v187
    %v189 = vsel %vm188, 1, 0
    %v190 = vcvt.s32.f32 %v189
    %v191 = vld [vmem:[#allocation2] sm:$0xff]
    %v192 = vld [vmem:[#allocation2 + $0x8] sm:$0xff]
    %vm193 = vcmask 130048
    %v195 = vsel %vm193, %v190, 0
    %197 = vmatpush.msra.mxu0 0.0
    %198 = vmatpush.msra.mxu0 0.0
    %199 = vmatpush.msra.mxu0 0.0
    %200 = vmatpush.msra.mxu0 0.0
    %201 = vmatpush.msra.mxu0 0.0
    %202 = vmatpush.msra.mxu0 0.0
    %203 = vmatpush.msra.mxu0 0.0
    %204 = vmatpush.msra.mxu0 0.0
    %205 = vmatpush.msra.mxu0 0.0
    %206 = vmatpush.msra.mxu0 0.0
    %207 = vmatpush.msra.mxu0 0.0
    %208 = vmatpush.msra.mxu0 0.0
    %209 = vmatpush.msra.mxu0 0.0
    %210 = vmatpush.msra.mxu0 0.0
    %211 = vmatpush.msra.mxu0 %v192
    %212 = vmatpush.msra.mxu0 %v191
    %213 = vmatmul.f32.gmra.mxu0 %v195
    %v214 = vpop.f32.mrf.mxu0
    %v215 = vadd.f32 0.0, %v214
    %216 = vdwg.mxu0
    %v217 = vld [vmem:[%s1] sm:$0xff]
    %218 = vset.pattern.permute.xlu0 0
    %219 = vperm.xlu0 %218, %v217
    %v220 = vpop.permute.xlu0 %219
    %vm221 = vcmp.eq.s32.totalorder %v184, %v220
    %v222 = vsel %vm221, 1, 0
    %v223 = vcvt.s32.f32 %v222
    %v224 = vld [vmem:[#allocation5] sm:$0xff]
    %v225 = vld [vmem:[#allocation5 + $0x8] sm:$0x1f]
    %vm226 = vcmask 105472
    %v228 = vsel %vm226, %v223, 0
    %vm230 = vcmask 1044480
    %v232 = vsel %vm230, %v225, 0
    %234 = vmatpush.msra.mxu0 0.0
    %235 = vmatpush.msra.mxu0 0.0
    %236 = vmatpush.msra.mxu0 0.0
    %237 = vmatpush.msra.mxu0 0.0
    %238 = vmatpush.msra.mxu0 0.0
    %239 = vmatpush.msra.mxu0 0.0
    %240 = vmatpush.msra.mxu0 0.0
    %241 = vmatpush.msra.mxu0 0.0
    %242 = vmatpush.msra.mxu0 0.0
    %243 = vmatpush.msra.mxu0 0.0
    %244 = vmatpush.msra.mxu0 0.0
    %245 = vmatpush.msra.mxu0 0.0
    %246 = vmatpush.msra.mxu0 0.0
    %247 = vmatpush.msra.mxu0 0.0
    %248 = vmatpush.msra.mxu0 %v232
    %249 = vmatpush.msra.mxu0 %v224
    %250 = vmatmul.f32.gmra.mxu0 %v228
    %v251 = vpop.f32.mrf.mxu0
    %v252 = vadd.f32 0.0, %v251
    %253 = vdwg.mxu0
    %v254 = vld [vmem:[%s2] sm:$0xff]
    %v255 = vld [vmem:[#allocation7] sm:$0xff]
    %v256 = vld [vmem:[#allocation7 + $0x8] sm:$0xff]
    %v257 = vld [vmem:[#allocation7 + $0x10] sm:$0xff]
    %v258 = vld [vmem:[#allocation7 + $0x18] sm:$0xff]
    %v259 = vld [vmem:[#allocation8] sm:$0xff]
    %v260 = vld [vmem:[#allocation8 + $0x8] sm:$0xff]
    %v261 = vld [vmem:[#allocation8 + $0x10] sm:$0xff]
    %v262 = vld [vmem:[#allocation8 + $0x18] sm:$0xff]
    %vm263 = vcmask 261120
    %v265 = vsel %vm263, %v252, 0
    %267 = vmatpush.msra.mxu0 0.0
    %268 = vmatpush.msra.mxu0 0.0
    %269 = vmatpush.msra.mxu0 0.0
    %270 = vmatpush.msra.mxu0 0.0
    %271 = vmatpush.msra.mxu0 0.0
    %272 = vmatpush.msra.mxu0 0.0
    %273 = vmatpush.msra.mxu0 0.0
    %274 = vmatpush.msra.mxu0 0.0
    %275 = vmatpush.msra.mxu0 0.0
    %276 = vmatpush.msra.mxu0 0.0
    %277 = vmatpush.msra.mxu0 0.0
    %278 = vmatpush.msra.mxu0 0.0
    %279 = vmatpush.msra.mxu0 %v262
    %280 = vmatpush.msra.mxu0 %v261
    %281 = vmatpush.msra.mxu0 %v260
    %282 = vmatpush.msra.mxu0 %v259
    %283 = vmatmul.f32.gmra.mxu0 %v265
    %v284 = vpop.f32.mrf.mxu0
    %v285 = vadd.f32 0.0, %v284
    %286 = vdwg.mxu0
    %v288 = vsel %vm263, %v215, 0
    %290 = vmatpush.msra.mxu0 0.0
    %291 = vmatpush.msra.mxu0 0.0
    %292 = vmatpush.msra.mxu0 0.0
    %293 = vmatpush.msra.mxu0 0.0
    %294 = vmatpush.msra.mxu0 0.0
    %295 = vmatpush.msra.mxu0 0.0
    %296 = vmatpush.msra.mxu0 0.0
    %297 = vmatpush.msra.mxu0 0.0
    %298 = vmatpush.msra.mxu0 0.0
    %299 = vmatpush.msra.mxu0 0.0
    %300 = vmatpush.msra.mxu0 0.0
    %301 = vmatpush.msra.mxu0 0.0
    %302 = vmatpush.msra.mxu0 %v258
    %303 = vmatpush.msra.mxu0 %v257
    %304 = vmatpush.msra.mxu0 %v256
    %305 = vmatpush.msra.mxu0 %v255
    %306 = vmatmul.f32.gmra.mxu0 %v288
    %v307 = vpop.f32.mrf.mxu0
    %v308 = vadd.f32 %v285, %v307
    %309 = vdwg.mxu0
    %v310 = vld [vmem:[%s8] sm:$0xf]
    %vm311 = vcmask 31744
    %v313 = vsel %vm311, %v254, 0
    %vm315 = vcmask 1043456
    %v317 = vsel %vm315, %v310, 0
    %319 = vmatpush.msra.mxu0 0.0
    %320 = vmatpush.msra.mxu0 0.0
    %321 = vmatpush.msra.mxu0 0.0
    %322 = vmatpush.msra.mxu0 0.0
    %323 = vmatpush.msra.mxu0 0.0
    %324 = vmatpush.msra.mxu0 0.0
    %325 = vmatpush.msra.mxu0 0.0
    %326 = vmatpush.msra.mxu0 0.0
    %327 = vmatpush.msra.mxu0 0.0
    %328 = vmatpush.msra.mxu0 0.0
    %329 = vmatpush.msra.mxu0 0.0
    %330 = vmatpush.msra.mxu0 0.0
    %331 = vmatpush.msra.mxu0 0.0
    %332 = vmatpush.msra.mxu0 0.0
    %333 = vmatpush.msra.mxu0 0.0
    %334 = vmatpush.msra.mxu0 %v317
    %335 = vmatmul.f32.gmra.mxu0 %v313
    %v336 = vpop.f32.mrf.mxu0
    %v337 = vadd.f32 0.0, %v336
    %338 = vdwg.mxu0
    %v339 = vadd.f32 %v308, %v337
    %v340 = vld [vmem:[%s3] sm:$0xff]
    %v341 = vld [vmem:[%s11] sm:$0x1]
    %v343 = vperm.slane %v341, 0
    %v345 = vadd.f32 %v339, %v343
    %v346 = vld [vmem:[#allocation11] sm:$0xff]
    %v347 = vld [vmem:[#allocation11 + $0x8] sm:$0xff]
    %v348 = vld [vmem:[#allocation11 + $0x10] sm:$0xff]
    %v349 = vld [vmem:[#allocation11 + $0x18] sm:$0xff]
    %v351 = vsel %vm263, %v340, 0
    %353 = vmatpush.msra.mxu0 0.0
    %354 = vmatpush.msra.mxu0 0.0
    %355 = vmatpush.msra.mxu0 0.0
    %356 = vmatpush.msra.mxu0 0.0
    %357 = vmatpush.msra.mxu0 0.0
    %358 = vmatpush.msra.mxu0 0.0
    %359 = vmatpush.msra.mxu0 0.0
    %360 = vmatpush.msra.mxu0 0.0
    %361 = vmatpush.msra.mxu0 0.0
    %362 = vmatpush.msra.mxu0 0.0
    %363 = vmatpush.msra.mxu0 0.0
    %364 = vmatpush.msra.mxu0 0.0
    %365 = vmatpush.msra.mxu0 %v349
    %366 = vmatpush.msra.mxu0 %v348
    %367 = vmatpush.msra.mxu0 %v347
    %368 = vmatpush.msra.mxu0 %v346
    %369 = vmatmul.f32.gmra.mxu0 %v351
    %v370 = vpop.f32.mrf.mxu0
    %v371 = vadd.f32 0.0, %v370
    %372 = vdwg.mxu0
    %v373 = vadd.f32 %v345, %v371
    %v374 = vxor.u32 %v373, 2147483648
    %v375 = vmul.f32 %v374, 1.442695
    %v376 = vpow.pop %v375
    %v377 = vadd.f32 %v376, 1.0
    %v378 = vrcp.pop %v377
    %v379 = vmul.f32 %v377, %v378
    %v380 = vsub.f32 1.0, %v379
    %v381 = vmul.f32 %v378, %v380
    %v382 = vadd.f32 %v378, %v381
    %vm383 = vweird.f32 %v377
    %vm384 = vweird.f32 %v378
    %vm385 = vmor %vm383, %vm384
    %v386 = vsel %vm385, %v378, %v382
    %v387 = vand.u32 2147483647, %v377
    %vm388 = vcmp.eq.f32.partialorder %v387, 8.507059e+37
    %v389 = vand.u32 %v377, 2147483648
    %v390 = vor.u32 1.1754944e-38, %v389
    %v391 = vsel %vm388, %v390, %v386
    %v392 = vmul.f32 1.0, %v391
    %393 = vrot.lane.b32.xlu0 %v343, 96
    %v394 = vpop.permute.xlu0 %393
    %v396 = vadd.f32 %v371, %v394
    %398 = vrot.lane.b32.xlu0 %v396, 64
    %v399 = vpop.permute.xlu0 %398
    %v401 = vmul.f32 %v392, %v399
    %403 = vrot.lane.b32.xlu0 %v401, 64
    %v404 = vpop.permute.xlu0 %403
    %v406 = vadd.f32 %v345, %v404
    %v407 = vtanh.pop %v406
    %v408 = vsub.f32 1.0, %v392
    %410 = vrot.lane.b32.xlu0 %v407, 96
    %v411 = vpop.permute.xlu0 %410
    %v413 = vmul.f32 %v408, %v411
    %414 = vrot.lane.b32.xlu0 %v340, 32
    %v415 = vpop.permute.xlu0 %414
    %v417 = vmul.f32 %v392, %v415
    %v418 = vadd.f32 %v413, %v417
    %420 = vrot.lane.b32.xlu0 %v418, 96
    %v421 = vpop.permute.xlu0 %420
    %423 = vst.msk [vmem:[#allocation17] sm:$0xff] %vm263, %v421
    %v424 = vld [vmem:[#allocation10] sm:$0xff]
    %v425 = vld [vmem:[#allocation10 + $0x8] sm:$0xff]
    %v426 = vld [vmem:[#allocation10 + $0x10] sm:$0xff]
    %v427 = vld [vmem:[#allocation10 + $0x18] sm:$0xff]
    %s428 = scalar_lea.vmem %s3, 8
    %v429 = vld [vmem:[%s428] sm:$0xff]
    %s430 = scalar_lea.vmem %s11, 1
    %v431 = vld [vmem:[%s430] sm:$0x1]
    %v433 = vperm.slane %v431, 0
    %v435 = vsel %vm263, %v421, 0
    %437 = vmatpush.msra.mxu0 0.0
    %438 = vmatpush.msra.mxu0 0.0
    %439 = vmatpush.msra.mxu0 0.0
    %440 = vmatpush.msra.mxu0 0.0
    %441 = vmatpush.msra.mxu0 0.0
    %442 = vmatpush.msra.mxu0 0.0
    %443 = vmatpush.msra.mxu0 0.0
    %444 = vmatpush.msra.mxu0 0.0
    %445 = vmatpush.msra.mxu0 0.0
    %446 = vmatpush.msra.mxu0 0.0
    %447 = vmatpush.msra.mxu0 0.0
    %448 = vmatpush.msra.mxu0 0.0
    %449 = vmatpush.msra.mxu0 %v427
    %450 = vmatpush.msra.mxu0 %v426
    %451 = vmatpush.msra.mxu0 %v425
    %452 = vmatpush.msra.mxu0 %v424
    %453 = vmatmul.f32.gmra.mxu0 %v435
    %v454 = vpop.f32.mrf.mxu0
    %v455 = vadd.f32 %v433, %v454
    %456 = vdwg.mxu0
    %s457 = scalar_lea.vmem [#allocation11], 32
    %v458 = vld [vmem:[%s457] sm:$0xff]
    %v459 = vld [vmem:[%s457 + $0x8] sm:$0xff]
    %v460 = vld [vmem:[%s457 + $0x10] sm:$0xff]
    %v461 = vld [vmem:[%s457 + $0x18] sm:$0xff]
    %v463 = vsel %vm263, %v429, 0
    %465 = vmatpush.msra.mxu0 0.0
    %466 = vmatpush.msra.mxu0 0.0
    %467 = vmatpush.msra.mxu0 0.0
    %468 = vmatpush.msra.mxu0 0.0
    %469 = vmatpush.msra.mxu0 0.0
    %470 = vmatpush.msra.mxu0 0.0
    %471 = vmatpush.msra.mxu0 0.0
    %472 = vmatpush.msra.mxu0 0.0
    %473 = vmatpush.msra.mxu0 0.0
    %474 = vmatpush.msra.mxu0 0.0
    %475 = vmatpush.msra.mxu0 0.0
    %476 = vmatpush.msra.mxu0 0.0
    %477 = vmatpush.msra.mxu0 %v461
    %478 = vmatpush.msra.mxu0 %v460
    %479 = vmatpush.msra.mxu0 %v459
    %480 = vmatpush.msra.mxu0 %v458
    %481 = vmatmul.f32.gmra.mxu0 %v463
    %v482 = vpop.f32.mrf.mxu0
    %v483 = vadd.f32 0.0, %v482
    %484 = vdwg.mxu0
    %v485 = vadd.f32 %v455, %v483
    %v486 = vxor.u32 %v485, 2147483648
    %v487 = vmul.f32 %v486, 1.442695
    %v488 = vpow.pop %v487
    %v489 = vadd.f32 %v488, 1.0
    %v490 = vrcp.pop %v489
    %v491 = vmul.f32 %v489, %v490
    %v492 = vsub.f32 1.0, %v491
    %v493 = vmul.f32 %v490, %v492
    %v494 = vadd.f32 %v490, %v493
    %vm495 = vweird.f32 %v489
    %vm496 = vweird.f32 %v490
    %vm497 = vmor %vm495, %vm496
    %v498 = vsel %vm497, %v490, %v494
    %v499 = vand.u32 2147483647, %v489
    %vm500 = vcmp.eq.f32.partialorder %v499, 8.507059e+37
    %v501 = vand.u32 %v489, 2147483648
    %v502 = vor.u32 1.1754944e-38, %v501
    %v503 = vsel %vm500, %v502, %v498
    %v504 = vmul.f32 1.0, %v503
    %505 = vrot.lane.b32.xlu0 %v433, 96
    %v506 = vpop.permute.xlu0 %505
    %v508 = vadd.f32 %v483, %v506
    %510 = vrot.lane.b32.xlu0 %v508, 64
    %v511 = vpop.permute.xlu0 %510
    %v513 = vmul.f32 %v504, %v511
    %515 = vrot.lane.b32.xlu0 %v513, 64
    %v516 = vpop.permute.xlu0 %515
    %v518 = vadd.f32 %v455, %v516
    %v519 = vtanh.pop %v518
    %v520 = vsub.f32 1.0, %v504
    %522 = vrot.lane.b32.xlu0 %v519, 96
    %v523 = vpop.permute.xlu0 %522
    %v525 = vmul.f32 %v520, %v523
    %526 = vrot.lane.b32.xlu0 %v429, 32
    %v527 = vpop.permute.xlu0 %526
    %v529 = vmul.f32 %v504, %v527
    %v530 = vadd.f32 %v525, %v529
    %532 = vrot.lane.b32.xlu0 %v530, 96
    %v533 = vpop.permute.xlu0 %532
    %s535 = scalar_lea.vmem [#allocation17], 8
    %536 = vst.msk [vmem:[%s535] sm:$0xff] %vm263, %v533
    %v537 = vld [vmem:[#allocation13] sm:$0xff]
    %v538 = vld [vmem:[#allocation13 + $0x8] sm:$0xff]
    %v539 = vld [vmem:[#allocation13 + $0x10] sm:$0xff]
    %v540 = vld [vmem:[#allocation13 + $0x18] sm:$0xff]
    %v541 = vld [vmem:[%s13] sm:$0x1]
    %v543 = vperm.slane %v541, 0
    %v545 = vsel %vm263, %v533, 0
    %547 = vmatpush.msra.mxu0 0.0
    %548 = vmatpush.msra.mxu0 0.0
    %549 = vmatpush.msra.mxu0 0.0
    %550 = vmatpush.msra.mxu0 0.0
    %551 = vmatpush.msra.mxu0 0.0
    %552 = vmatpush.msra.mxu0 0.0
    %553 = vmatpush.msra.mxu0 0.0
    %554 = vmatpush.msra.mxu0 0.0
    %555 = vmatpush.msra.mxu0 0.0
    %556 = vmatpush.msra.mxu0 0.0
    %557 = vmatpush.msra.mxu0 0.0
    %558 = vmatpush.msra.mxu0 0.0
    %559 = vmatpush.msra.mxu0 %v540
    %560 = vmatpush.msra.mxu0 %v539
    %561 = vmatpush.msra.mxu0 %v538
    %562 = vmatpush.msra.mxu0 %v537
    %563 = vmatmul.f32.gmra.mxu0 %v545
    %v564 = vpop.f32.mrf.mxu0
    %v565 = vadd.f32 %v543, %v564
    %566 = vdwg.mxu0
    %vm567 = vcmp.gt.f32.partialorder %v565, 0.0
    %v568 = vmul.f32 %v565, 0.01
    %v569 = vsel %vm567, %v565, %v568
    %v570 = vld [vmem:[#allocation14] sm:$0xff]
    %v571 = vld [vmem:[#allocation14 + $0x8] sm:$0xff]
    %v572 = vld [vmem:[#allocation14 + $0x10] sm:$0xff]
    %v573 = vld [vmem:[#allocation14 + $0x18] sm:$0xff]
    %v574 = vld [vmem:[%s15] sm:$0x1]
    %v576 = vperm.slane %v574, 0
    %v579 = vsel %vm263, %v569, 0
    %581 = vmatpush.msra.mxu0 0.0
    %582 = vmatpush.msra.mxu0 0.0
    %583 = vmatpush.msra.mxu0 0.0
    %584 = vmatpush.msra.mxu0 0.0
    %585 = vmatpush.msra.mxu0 0.0
    %586 = vmatpush.msra.mxu0 0.0
    %587 = vmatpush.msra.mxu0 0.0
    %588 = vmatpush.msra.mxu0 0.0
    %589 = vmatpush.msra.mxu0 0.0
    %590 = vmatpush.msra.mxu0 0.0
    %591 = vmatpush.msra.mxu0 0.0
    %592 = vmatpush.msra.mxu0 0.0
    %593 = vmatpush.msra.mxu0 %v573
    %594 = vmatpush.msra.mxu0 %v572
    %595 = vmatpush.msra.mxu0 %v571
    %596 = vmatpush.msra.mxu0 %v570
    %597 = vmatmul.f32.gmra.mxu0 %v579
    %v598 = vpop.f32.mrf.mxu0
    %v599 = vadd.f32 %v576, %v598
    %600 = vdwg.mxu0
    %601 = vst [vmem:[#allocation16] sm:$0xff] %v599
    // Predicated region
    $region98: #{tpu_custom_call.1} parent=1 // pred_check
      _
    $region99: #{tpu_custom_call.1} parent=1 // pred_check_branch
      %603 = sbr.rel (0) target = $region101
    $region100: #{tpu_custom_call.1} parent=1 // pred_region
      %605 = vsyncadd [#allocation4], 0
      %s607 = sshll.u32 [#allocation16], 4
      %s608 = int_to_ptr.vmem [resolvable:$true] %s607
      %s609 = sshll.u32 %s16, 4
      %s610 = int_to_ptr.hbm [resolvable:$true] %s609
      %612 = dma.vmem_to_hbm [thread:$0]  %s608, 128, %s610, [#allocation4]
    $region101: #{tpu_custom_call.1} parent=1 // pred_fallthru
      _
    // Predicated region
    $region102: #{tpu_custom_call.1} parent=1 // pred_check
      _
    $region103: #{tpu_custom_call.1} parent=1 // pred_check_branch
      %614 = sbr.rel (0) target = $region105
    $region104: #{tpu_custom_call.1} parent=1 // pred_region
      %616 = vsyncadd [#allocation18], 0
      %s617 = sshll.u32 [#allocation17], 4
      %s618 = int_to_ptr.vmem [resolvable:$true] %s617
      %s619 = sshll.u32 %s17, 4
      %s620 = int_to_ptr.hbm [resolvable:$true] %s619
      %625 = dma.vmem_to_hbm [thread:$0]  %s618, 256, %s620, [#allocation18], 128, 128, 8
    $region105: #{tpu_custom_call.1} parent=1 // pred_fallthru
      _
    // Predicated region
    $region106: #{tpu_custom_call.1} parent=1 // pred_check
      _
    $region107: #{tpu_custom_call.1} parent=1 // pred_check_branch
      %627 = sbr.rel (0) target = $region109
    $region108: #{tpu_custom_call.1} parent=1 // pred_region
      %629 = dma.done [#allocation4], 128
    $region109: #{tpu_custom_call.1} parent=1 // pred_fallthru
      _
    // Predicated region
    $region110: #{tpu_custom_call.1} parent=1 // pred_check
      _
    $region111: #{tpu_custom_call.1} parent=1 // pred_check_branch
      %631 = sbr.rel (0) target = $region113
    $region112: #{tpu_custom_call.1} parent=1 // pred_region
      %633 = dma.done [#allocation18], 256
    $region113: #{tpu_custom_call.1} parent=1 // pred_fallthru
      _
    %634 = vsyncpa [#allocation3], 1
    %635 = vsyncpa [#allocation6], 1
    %636 = vsyncpa [#allocation9], 1
    %637 = vsyncpa [#allocation12], 1
    %638 = vsyncpa [#allocation15], 1
    %639 = vsyncpa [#allocation4], 1
    %640 = vsyncpa [#allocation18], 1

</llo_original>
